<compile_context>
chip_gen: v7x
topology: tpu7x:2x2x1
jax: 0.10.0
libtpu: 0.0.40
codegen_flags: <defaults>
</compile_context>

<pallas_src>
import jax
import jax.numpy as jnp
from jax.experimental import pallas as pl
from jax.experimental.pallas import tpu as pltpu


def _round_up(n, m):
    return ((n + m - 1) // m) * m


def _bahar_ff_kernel(x_ref, w1_ref, b1_ref, w2_ref, b2_ref, o_ref):
    # First layer on the MXU: bf16 operands, f32 accumulation.
    h = jnp.dot(x_ref[...], w1_ref[...], preferred_element_type=jnp.float32)
    # Bias-add + sigmoid in f32 (EUP transcendental; free slot vs. VALU/MXU).
    h = jax.nn.sigmoid(h + b1_ref[...])
    # Second layer: cast activations to bf16 for the MXU, accumulate in f32.
    out = jnp.dot(h.astype(jnp.bfloat16), w2_ref[...],
                  preferred_element_type=jnp.float32)
    o_ref[...] = (out + b2_ref[...]).astype(o_ref.dtype)


def _bahar_ff(x, w1, b1, w2, b2, *, tile_b=512):
    """Fused two-layer MLP forward. x: [B, in], w1: [in, hid], w2: [hid, out]."""
    B, IN = x.shape
    HID, OUT = w2.shape
    assert w1.shape == (IN, HID)

    # Lane-dense output: pad OUT up to a multiple of 128 (min 128).
    out_pad = _round_up(OUT, 128)
    # Batch tile: multiple of 8 sublanes, clamped to the batch size.
    tile_b = max(8, _round_up(min(tile_b, B), 8))
    b_pad = _round_up(B, tile_b)
    grid_b = b_pad // tile_b

    # Cast matmul operands to bf16; zero-pad batch rows and output lanes.
    x_p = jnp.zeros((b_pad, IN), jnp.bfloat16).at[:B].set(x.astype(jnp.bfloat16))
    w1_bf = w1.astype(jnp.bfloat16)
    b1_f = b1.astype(jnp.float32)
    w2_p = jnp.zeros((HID, out_pad), jnp.bfloat16).at[:, :OUT].set(
        w2.astype(jnp.bfloat16))
    b2_p = jnp.zeros((1, out_pad), jnp.float32).at[:, :OUT].set(
        b2.astype(jnp.float32))

    cost = pl.CostEstimate(
        flops=2 * b_pad * IN * HID + 2 * b_pad * HID * out_pad,
        transcendentals=b_pad * HID,
        bytes_accessed=(x_p.size * 2 + w1_bf.size * 2 + w2_p.size * 2
                        + b1_f.size * 4 + b2_p.size * 4
                        + b_pad * out_pad * 4),
    )

    out_p = pl.pallas_call(
        _bahar_ff_kernel,
        out_shape=jax.ShapeDtypeStruct((b_pad, out_pad), jnp.float32),
        grid_spec=pltpu.PrefetchScalarGridSpec(
            num_scalar_prefetch=0,
            grid=(grid_b,),
            in_specs=[
                # x: blocked along batch -> double-buffered per grid step.
                pl.BlockSpec((tile_b, IN), lambda i: (i, 0)),
                # Weights / biases: constant index_map -> VMEM-resident.
                pl.BlockSpec((IN, HID), lambda i: (0, 0)),
                pl.BlockSpec((1, HID), lambda i: (0, 0)),
                pl.BlockSpec((HID, out_pad), lambda i: (0, 0)),
                pl.BlockSpec((1, out_pad), lambda i: (0, 0)),
            ],
            out_specs=pl.BlockSpec((tile_b, out_pad), lambda i: (i, 0)),
        ),
        compiler_params=pltpu.CompilerParams(
            dimension_semantics=("parallel",)),
        cost_estimate=cost,
    )(x_p, w1_bf, b1_f, w2_p, b2_p)

    return out_p[:B, :OUT]


bahar_ff = jax.jit(_bahar_ff, static_argnames=("tile_b",))


def init_params(key, input_size, hidden_size, output_size):
    """Deterministic synthetic params matching nn.Linear shapes (transposed)."""
    k1, k2, k3, k4 = jax.random.split(key, 4)
    # PyTorch nn.Linear default init is U(-1/sqrt(fan_in), 1/sqrt(fan_in)).
    lim1 = 1.0 / (input_size ** 0.5)
    lim2 = 1.0 / (hidden_size ** 0.5)
    w1 = jax.random.uniform(k1, (input_size, hidden_size), jnp.float32, -lim1, lim1)
    b1 = jax.random.uniform(k2, (1, hidden_size), jnp.float32, -lim1, lim1)
    w2 = jax.random.uniform(k3, (hidden_size, output_size), jnp.float32, -lim2, lim2)
    b2 = jax.random.uniform(k4, (1, output_size), jnp.float32, -lim2, lim2)
    return w1, b1, w2, b2


if __name__ == "__main__":
    # Small shapes consistent with the module: batch=8, inputSize=16,
    # hidden_size=32, outputSize=8.  (Toy size: the kernel is pure fixed
    # overhead here; the tiling only pays off at realistic batch sizes.)
    B, IN, HID, OUT = 8, 16, 32, 8

    key = jax.random.PRNGKey(0)
    kx, kp = jax.random.split(key)
    x = jax.random.normal(kx, (B, IN), jnp.float32)
    w1, b1, w2, b2 = init_params(kp, IN, HID, OUT)

    out = bahar_ff(x, w1, b1, w2, b2)
    out = jax.block_until_ready(out)
    assert out.shape == (B, OUT)

    # Reference that mimics the kernel's bf16-operand / f32-accumulate math.
    x_bf, w1_bf, w2_bf = (a.astype(jnp.bfloat16) for a in (x, w1, w2))
    h_ref = jax.nn.sigmoid(
        jnp.dot(x_bf, w1_bf, preferred_element_type=jnp.float32) + b1)
    ref_bf = jnp.dot(h_ref.astype(jnp.bfloat16), w2_bf,
                     preferred_element_type=jnp.float32) + b2
    # Full-f32 PyTorch-equivalent reference (loose tolerance: bf16 operands).
    ref_f32 = jax.nn.sigmoid(x @ w1 + b1) @ w2 + b2

    assert jnp.allclose(out, ref_bf, atol=1e-3, rtol=1e-3)
    assert jnp.allclose(out, ref_f32, atol=5e-2, rtol=5e-2)

    print("KERNEL_OK")
</pallas_src>

<mosaic_0001>
module attributes {stable_mosaic.version = 11 : i64} {
  func.func @_bahar_ff_kernel(%arg0: i32, %arg1: memref<8x16xbf16, #tpu.memory_space<vmem>>, %arg2: memref<16x32xbf16, #tpu.memory_space<vmem>>, %arg3: memref<1x32xf32, #tpu.memory_space<vmem>>, %arg4: memref<32x128xbf16, #tpu.memory_space<vmem>>, %arg5: memref<1x128xf32, #tpu.memory_space<vmem>>, %arg6: memref<8x128xf32, #tpu.memory_space<vmem>>) attributes {dimension_semantics = [#tpu.dimension_semantics<parallel>], iteration_bounds = array<i64: 1>, scalar_prefetch = 0 : i64, scratch_operands = 0 : i64, tpu.core_type = #tpu.core_type<tc>, window_params = [{transform_indices = @transform_0, window_bounds = array<i64: 8, 16>}, {pipeline_mode = #tpu.pipeline_mode<synchronous>, transform_indices = @transform_1, window_bounds = array<i64: 16, 32>}, {pipeline_mode = #tpu.pipeline_mode<synchronous>, transform_indices = @transform_2, window_bounds = array<i64: 1, 32>}, {pipeline_mode = #tpu.pipeline_mode<synchronous>, transform_indices = @transform_3, window_bounds = array<i64: 32, 128>}, {pipeline_mode = #tpu.pipeline_mode<synchronous>, transform_indices = @transform_4, window_bounds = array<i64: 1, 128>}, {transform_indices = @transform_5, window_bounds = array<i64: 8, 128>}]} {
    %c0 = arith.constant 0 : index
    %c0_0 = arith.constant 0 : index
    %0 = vector.load %arg1[%c0, %c0_0] : memref<8x16xbf16, #tpu.memory_space<vmem>>, vector<8x16xbf16>
    %c0_1 = arith.constant 0 : index
    %c0_2 = arith.constant 0 : index
    %1 = vector.load %arg2[%c0_1, %c0_2] : memref<16x32xbf16, #tpu.memory_space<vmem>>, vector<16x32xbf16>
    %cst = arith.constant dense<0.000000e+00> : vector<8x32xf32>
    %2 = tpu.matmul %0, %1, %cst {dimension_numbers = #tpu.dot_dimension_numbers<[1], [0], [0], [1], [0, 0, 1, 1], [], []>} : vector<8x16xbf16>, vector<16x32xbf16>, vector<8x32xf32> -> vector<8x32xf32>
    %c0_3 = arith.constant 0 : index
    %c0_4 = arith.constant 0 : index
    %3 = vector.load %arg3[%c0_3, %c0_4] : memref<1x32xf32, #tpu.memory_space<vmem>>, vector<1x32xf32>
    %4 = vector.broadcast %3 : vector<1x32xf32> to vector<8x32xf32>
    %5 = arith.addf %2, %4 : vector<8x32xf32>
    %6 = arith.negf %5 : vector<8x32xf32>
    %7 = math.exp %6 : vector<8x32xf32>
    %cst_5 = arith.constant 1.000000e+00 : f32
    %8 = vector.broadcast %cst_5 : f32 to vector<8x32xf32>
    %9 = arith.addf %8, %7 : vector<8x32xf32>
    %10 = arith.divf %8, %9 : vector<8x32xf32>
    %11 = arith.truncf %10 : vector<8x32xf32> to vector<8x32xbf16>
    %c0_6 = arith.constant 0 : index
    %c0_7 = arith.constant 0 : index
    %12 = vector.load %arg4[%c0_6, %c0_7] : memref<32x128xbf16, #tpu.memory_space<vmem>>, vector<32x128xbf16>
    %cst_8 = arith.constant dense<0.000000e+00> : vector<8x128xf32>
    %13 = tpu.matmul %11, %12, %cst_8 {dimension_numbers = #tpu.dot_dimension_numbers<[1], [0], [0], [1], [0, 0, 1, 1], [], []>} : vector<8x32xbf16>, vector<32x128xbf16>, vector<8x128xf32> -> vector<8x128xf32>
    %c0_9 = arith.constant 0 : index
    %c0_10 = arith.constant 0 : index
    %14 = vector.load %arg5[%c0_9, %c0_10] : memref<1x128xf32, #tpu.memory_space<vmem>>, vector<1x128xf32>
    %15 = vector.broadcast %14 : vector<1x128xf32> to vector<8x128xf32>
    %16 = arith.addf %13, %15 : vector<8x128xf32>
    %c0_11 = arith.constant 0 : index
    %c0_12 = arith.constant 0 : index
    %17 = vector.load %arg6[%c0_11, %c0_12] : memref<8x128xf32, #tpu.memory_space<vmem>>, vector<8x128xf32>
    tpu.vector_store %arg6[%c0_11, %c0_12], %16 {strides = array<i32>} : memref<8x128xf32, #tpu.memory_space<vmem>>, vector<8x128xf32>,
    return
  }
  func.func @transform_0(%arg0: i32) -> (i32, i32) {
    %c0_i32 = arith.constant 0 : i32
    %c0_i32_0 = arith.constant 0 : i32
    return %arg0, %c0_i32 : i32, i32
  }
  func.func @transform_1(%arg0: i32) -> (i32, i32) {
    %c0_i32 = arith.constant 0 : i32
    %c0_i32_0 = arith.constant 0 : i32
    %c0_i32_1 = arith.constant 0 : i32
    return %c0_i32, %c0_i32_0 : i32, i32
  }
  func.func @transform_2(%arg0: i32) -> (i32, i32) {
    %c0_i32 = arith.constant 0 : i32
    %c0_i32_0 = arith.constant 0 : i32
    %c0_i32_1 = arith.constant 0 : i32
    return %c0_i32, %c0_i32_0 : i32, i32
  }
  func.func @transform_3(%arg0: i32) -> (i32, i32) {
    %c0_i32 = arith.constant 0 : i32
    %c0_i32_0 = arith.constant 0 : i32
    %c0_i32_1 = arith.constant 0 : i32
    return %c0_i32, %c0_i32_0 : i32, i32
  }
  func.func @transform_4(%arg0: i32) -> (i32, i32) {
    %c0_i32 = arith.constant 0 : i32
    %c0_i32_0 = arith.constant 0 : i32
    %c0_i32_1 = arith.constant 0 : i32
    return %c0_i32, %c0_i32_0 : i32, i32
  }
  func.func @transform_5(%arg0: i32) -> (i32, i32) {
    %c0_i32 = arith.constant 0 : i32
    %c0_i32_0 = arith.constant 0 : i32
    return %arg0, %c0_i32 : i32, i32
  }
}

</mosaic_0001>

<llo_original>
// kernel: _bahar_ff.1
$region0: #{_bahar_ff.1}
  #allocation0 [shape = 'u32[]', space=smem, size = 0x4, offset = 0x4, fixed_abs, tag = 'smem constant byte address 0x4 - core index']
  #allocation1 [shape = 'u32[144,128]{1,0:T(1,128)}', space=vmem, size = 0x12000, scoped, tag = 'internal scratch']
  %s0 = inlined_call_operand.vmem [shape: bf16[8,16], index: 0, kind: input, shape index: {}]
  %s1 = inlined_call_operand.vmem [shape: bf16[16,32], index: 1, kind: input, shape index: {}]
  %s2 = inlined_call_operand.vmem [shape: f32[1,32], index: 2, kind: input, shape index: {}]
  %s3 = inlined_call_operand.vmem [shape: bf16[32,128], index: 3, kind: input, shape index: {}]
  %s4 = inlined_call_operand.vmem [shape: f32[1,128], index: 4, kind: input, shape index: {}]
  %s5 = inlined_call_operand.hbm [shape: f32[8,128], index: 5, kind: output, shape index: {}]
  %s6 = sld [smem:[#allocation0]]
  $region30: #{_bahar_ff.1} parent=0
    _
  %s8 = ssub.s32 1, %s6
  %s9 = scalar_select 0, %s8, %s6
  $region1: #{_bahar_ff.1} parent=0
    #allocation2 [shape = 'u8[4096]{0}', space=vmem, size = 0x1000, scoped, tag = 'output window, operand 0, single buffered']
    #allocation3 [shape = 's32[1]{0}', space=sflag, size = 0x4, scoped, tag = 'scoped memory for _bahar_ff.1']
    %10 = vsyncpa [#allocation3], 0
    // Predicated region
    $region2: #{_bahar_ff.1} parent=1 // pred_check
      _
    $region3: #{_bahar_ff.1} parent=1 // pred_check_branch
      %12 = sbr.rel (0) target = $region5
    $region4: #{_bahar_ff.1} parent=1 // pred_region
      _
    $region5: #{_bahar_ff.1} parent=1 // pred_fallthru
      _
    // Predicated region
    $region6: #{_bahar_ff.1} parent=1 // pred_check
      _
    $region7: #{_bahar_ff.1} parent=1 // pred_check_branch
      %14 = sbr.rel (0) target = $region9
    $region8: #{_bahar_ff.1} parent=1 // pred_region
      _
    $region9: #{_bahar_ff.1} parent=1 // pred_fallthru
      _
    // Predicated region
    $region10: #{_bahar_ff.1} parent=1 // pred_check
      _
    $region11: #{_bahar_ff.1} parent=1 // pred_check_branch
      %16 = sbr.rel (0) target = $region13
    $region12: #{_bahar_ff.1} parent=1 // pred_region
      _
    $region13: #{_bahar_ff.1} parent=1 // pred_fallthru
      _
    // Predicated region
    $region14: #{_bahar_ff.1} parent=1 // pred_check
      _
    $region15: #{_bahar_ff.1} parent=1 // pred_check_branch
      %18 = sbr.rel (0) target = $region17
    $region16: #{_bahar_ff.1} parent=1 // pred_region
      _
    $region17: #{_bahar_ff.1} parent=1 // pred_fallthru
      _
    // Predicated region
    $region18: #{_bahar_ff.1} parent=1 // pred_check
      _
    $region19: #{_bahar_ff.1} parent=1 // pred_check_branch
      %20 = sbr.rel (0) target = $region21
    $region20: #{_bahar_ff.1} parent=1 // pred_region
      _
    $region21: #{_bahar_ff.1} parent=1 // pred_fallthru
      _
    %v22 = vld [vmem:[%s0] sm:$0xf]
    %v23 = vld [vmem:[%s1] sm:$0xf]
    %v24 = vld [vmem:[%s1 + $0x4] sm:$0xf]
    %v25 = vld [vmem:[%s2] sm:$0x1]
    %v27 = vlaneseq
    %v28 = vshrl.u32 %v27, 7
    %v29 = vsub.s32 0, %v28
    %v30 = vrot.slane %v25, %v29
    %v34 = vunpack.c.l.b16 %v23
    %v35 = vunpack.c.l.b16 %v24
    %v36 = vpack.c.b16 %v35, %v34
    %vm38 = vcmask 130048
    %v40 = vsel %vm38, %v22, 0
    %42 = vmatprep.subr.bf16.mxu0 0
    %43 = vmatpush1.bf16.msra.mxu0 %v36
    %44 = vmatprep.subr.bf16.mxu0 0
    %45 = vmatpush1.bf16.msra.mxu0 0
    %46 = vmatprep.subr.bf16.mxu0 0
    %47 = vmatpush1.bf16.msra.mxu0 0
    %48 = vmatprep.subr.bf16.mxu0 0
    %49 = vmatpush1.bf16.msra.mxu0 0
    %50 = vmatprep.subr.bf16.mxu0 0
    %51 = vmatpush1.bf16.msra.mxu0 0
    %52 = vmatprep.subr.bf16.mxu0 0
    %53 = vmatpush1.bf16.msra.mxu0 0
    %54 = vmatprep.subr.bf16.mxu0 0
    %55 = vmatpush1.bf16.msra.mxu0 0
    %56 = vmatprep.subr.bf16.mxu0 0
    %57 = vmatpush1.bf16.msra.mxu0 0
    %58 = vmatprep.subr.bf16.mxu0 0
    %59 = vmatpush1.bf16.msra.mxu0 0
    %60 = vmatprep.subr.bf16.mxu0 0
    %61 = vmatpush1.bf16.msra.mxu0 0
    %62 = vmatprep.subr.bf16.mxu0 0
    %63 = vmatpush1.bf16.msra.mxu0 0
    %64 = vmatprep.subr.bf16.mxu0 0
    %65 = vmatpush1.bf16.msra.mxu0 0
    %66 = vmatprep.subr.bf16.mxu0 0
    %67 = vmatpush1.bf16.msra.mxu0 0
    %68 = vmatprep.subr.bf16.mxu0 0
    %69 = vmatpush1.bf16.msra.mxu0 0
    %70 = vmatprep.subr.bf16.mxu0 0
    %71 = vmatpush1.bf16.msra.mxu0 0
    %72 = vmatprep.subr.bf16.mxu0 0
    %73 = vmatpush1.bf16.msra.mxu0 0
    %74 = vmatprep.mubr.bf16.mxu0 0
    %75 = vmatmul.mubr.bf16.gmra.mrb[0].mxu0 %v40
    %v76 = vpop.f32.mrb[0].mxu0
    %v77 = vadd.f32 %v30, %v76
    %v78 = vpop.f32.mrb[0].mxu0
    %v79 = vpop.f32.mrb[0].mxu0
    %v80 = vpop.f32.mrb[0].mxu0
    %81 = vdwg.mxu0
    %v82 = vxor.u32 %v77, 2147483648
    %v83 = vmul.f32 %v82, 1.442695
    %v84 = vpow.pop %v83
    %v85 = vadd.f32 %v84, 1.0
    %v86 = vrcp.pop %v85
    %v87 = vmul.f32 1.0, %v86
    %v88 = vpack.c.bf16 %v87, %v87
    %v89 = vld [vmem:[%s3] sm:$0xf]
    %v90 = vld [vmem:[%s3 + $0x4] sm:$0xf]
    %v91 = vld [vmem:[%s3 + $0x8] sm:$0xf]
    %v92 = vld [vmem:[%s3 + $0xc] sm:$0xf]
    %v93 = vld [vmem:[%s4] sm:$0x1]
    %v95 = vlaneseq
    %v96 = vshrl.u32 %v95, 7
    %v97 = vsub.s32 0, %v96
    %v98 = vrot.slane %v93, %v97
    %v104 = vunpack.c.l.b16 %v89
    %v105 = vunpack.c.l.b16 %v90
    %v106 = vunpack.c.l.b16 %v91
    %v107 = vunpack.c.l.b16 %v92
    %v108 = vpack.c.b16 %v105, %v104
    %v109 = vpack.c.b16 %v107, %v106
    %vm112 = vcmask 261120
    %v114 = vsel %vm112, %v88, 0
    %116 = vmatprep.subr.bf16.mxu0 0
    %117 = vmatpush1.bf16.msra.mxu0 %v108
    %118 = vmatprep.subr.bf16.mxu0 0
    %119 = vmatpush1.bf16.msra.mxu0 %v109
    %120 = vmatprep.subr.bf16.mxu0 0
    %121 = vmatpush1.bf16.msra.mxu0 0
    %122 = vmatprep.subr.bf16.mxu0 0
    %123 = vmatpush1.bf16.msra.mxu0 0
    %124 = vmatprep.subr.bf16.mxu0 0
    %125 = vmatpush1.bf16.msra.mxu0 0
    %126 = vmatprep.subr.bf16.mxu0 0
    %127 = vmatpush1.bf16.msra.mxu0 0
    %128 = vmatprep.subr.bf16.mxu0 0
    %129 = vmatpush1.bf16.msra.mxu0 0
    %130 = vmatprep.subr.bf16.mxu0 0
    %131 = vmatpush1.bf16.msra.mxu0 0
    %132 = vmatprep.subr.bf16.mxu0 0
    %133 = vmatpush1.bf16.msra.mxu0 0
    %134 = vmatprep.subr.bf16.mxu0 0
    %135 = vmatpush1.bf16.msra.mxu0 0
    %136 = vmatprep.subr.bf16.mxu0 0
    %137 = vmatpush1.bf16.msra.mxu0 0
    %138 = vmatprep.subr.bf16.mxu0 0
    %139 = vmatpush1.bf16.msra.mxu0 0
    %140 = vmatprep.subr.bf16.mxu0 0
    %141 = vmatpush1.bf16.msra.mxu0 0
    %142 = vmatprep.subr.bf16.mxu0 0
    %143 = vmatpush1.bf16.msra.mxu0 0
    %144 = vmatprep.subr.bf16.mxu0 0
    %145 = vmatpush1.bf16.msra.mxu0 0
    %146 = vmatprep.subr.bf16.mxu0 0
    %147 = vmatpush1.bf16.msra.mxu0 0
    %148 = vmatprep.mubr.bf16.mxu0 0
    %149 = vmatmul.mubr.bf16.gmra.mrb[0].mxu0 %v114
    %v150 = vpop.f32.mrb[0].mxu0
    %v151 = vadd.f32 %v98, %v150
    %v152 = vpop.f32.mrb[0].mxu0
    %v153 = vpop.f32.mrb[0].mxu0
    %v154 = vpop.f32.mrb[0].mxu0
    %155 = vdwg.mxu0
    %156 = vst [vmem:[#allocation2] sm:$0xff] %v151
    // Predicated region
    $region22: #{_bahar_ff.1} parent=1 // pred_check
      _
    $region23: #{_bahar_ff.1} parent=1 // pred_check_branch
      %158 = sbr.rel (0) target = $region25
    $region24: #{_bahar_ff.1} parent=1 // pred_region
      %s160 = ssub.s32 128, 128
      %161 = vsyncadd [#allocation3], %s160
      %s163 = sshll.u32 [#allocation2], 4
      %s164 = int_to_ptr.vmem [resolvable:$true] %s163
      %166 = dma.vmem_to_hbm [thread:$0]  %s164, 128, %s5, [#allocation3]
    $region25: #{_bahar_ff.1} parent=1 // pred_fallthru
      _
    // Predicated region
    $region26: #{_bahar_ff.1} parent=1 // pred_check
      _
    $region27: #{_bahar_ff.1} parent=1 // pred_check_branch
      %168 = sbr.rel (0) target = $region29
    $region28: #{_bahar_ff.1} parent=1 // pred_region
      %169 = dma.done [#allocation3], 128
    $region29: #{_bahar_ff.1} parent=1 // pred_fallthru
      _
    %170 = vsyncpa [#allocation3], 1

</llo_original>
